<compile_context>
chip_gen: v5e
topology: v5e:2x2
jax: 0.10.0
libtpu: 0.0.40
codegen_flags: <defaults>
</compile_context>

<pallas_src>
import functools

import jax
import jax.numpy as jnp
from jax.experimental import pallas as pl
from jax.experimental.pallas import tpu as pltpu


_VMEM_LIMIT_BYTES = 48 * 1024 * 1024      # safe on v7x (64 MiB physical)
_VMEM_TILE_BUDGET = int(0.7 * _VMEM_LIMIT_BYTES)


def _backbone_view_avg_kernel(x_ref, w_ref, b_ref, aux_ref, pooled_ref, *, views):
    """Grid = (M_tiles, K_tiles); K (contraction) is the last, 'arbitrary' axis.

    x_ref:      (tm, tk)        f32   rows are (batch, view) pairs, batch-major
    w_ref:      (tk, Dp)        bf16  shared backbone weight slice
    b_ref:      (1, Dp)         f32   shared bias
    aux_ref:    (tm, Dp)        f32   per-(batch, view) features; also the
                                      resident f32 accumulator across K
    pooled_ref: (tm//views, Dp) f32   mean over views for this row tile
    """
    k = pl.program_id(1)
    nk = pl.num_programs(1)

    @pl.when(k == 0)
    def _():
        aux_ref[...] = jnp.zeros_like(aux_ref)

    # In-kernel f32 -> bf16 cast of the activation tile (free VALU filler under
    # the MXU); weights are already bf16, accumulation stays f32 in aux_ref.
    aux_ref[...] += jnp.dot(x_ref[...].astype(jnp.bfloat16), w_ref[...],
                            preferred_element_type=jnp.float32)

    @pl.when(k == nk - 1)
    def _():
        feat = aux_ref[...] + b_ref[...]              # (tm, Dp) f32
        aux_ref[...] = feat

        # Mean over view groups (rows are batch-major: b0v0..b0v(V-1), b1v0..).
        # Pure VPU: V strided sublane slices summed in f32, no MXU, no masks.
        tb = pooled_ref.shape[0]
        acc = aux_ref[pl.ds(0, tb, stride=views), :]
        for v in range(1, views):
            acc = acc + aux_ref[pl.ds(v, tb, stride=views), :]
        pooled_ref[...] = acc * (1.0 / views)


def _round_up(x, m):
    return (x + m - 1) // m * m


def _choose_tiles(m_pad, k_pad, d_pad, views, budget_bytes):
    """Pick (tm, tk) under a VMEM byte budget (double-buffered pipeline)."""
    m_group = 8 * views            # keeps tm % V == 0, tm % 8 == 0, tb % 8 == 0
    n_groups = m_pad // m_group

    def vmem_bytes(tm, tk):
        tb = tm // views
        return (2 * tm * tk * 4        # x tile, f32, double-buffered
                + 2 * tk * d_pad * 2   # W tile, bf16, double-buffered
                + 2 * tm * d_pad * 4   # aux accumulator / output
                + 2 * tb * d_pad * 4   # pooled output
                + 2 * d_pad * 4)       # bias

    tm_cands = sorted((m_group * t for t in range(1, n_groups + 1)
                       if n_groups % t == 0), reverse=True)
    tk_cands = sorted({tk for tk in (k_pad, 2048, 1024, 512, 256, 128)
                       if tk <= k_pad and k_pad % tk == 0}, reverse=True)

    # tm: largest divisor <= 512 rows that fits the budget with the minimum tk
    # (bigger tm => fewer M tiles => proportionally less W re-streaming).
    tm = None
    for cand in tm_cands:
        if cand <= 512 and vmem_bytes(cand, tk_cands[-1]) <= budget_bytes:
            tm = cand
            break
    if tm is None:
        tm = tm_cands[-1]              # smallest legal tile; best effort
    # Guarantee >= 2 M tiles whenever possible so the 'parallel' M axis can
    # shard across the two v7x TensorCores.
    if m_pad // tm < 2 and n_groups >= 2:
        for cand in tm_cands:
            if (cand < tm and m_pad // cand >= 2
                    and vmem_bytes(cand, tk_cands[-1]) <= budget_bytes):
                tm = cand
                break
    # tk: largest candidate that still fits the budget next to this tm.
    tk = tk_cands[-1]
    for cand in tk_cands:
        if vmem_bytes(tm, cand) <= budget_bytes:
            tk = cand
            break
    return tm, tk


def view_avg_aggregate(mvimages, w, b):
    """mvimages: (B, V, C, H, W) f32; w: (K, D); b: (D,) with K = C*H*W.

    Returns (pooled_view.squeeze(), aux) matching the PyTorch module:
      pooled_view: (B, D) squeezed; aux: (B, V, D) per-view features.
    """
    B, V, C, H, W_img = mvimages.shape
    K = C * H * W_img
    D = w.shape[1]
    M = B * V

    # ---- glue: flatten to batch-major rows, pad M/K/D to tiling multiples.
    # x stays f32: the bf16 cast is fused into the kernel (no HBM pre-pass).
    k_pad = _round_up(K, 128)
    d_pad = _round_up(D, 128)
    m_group = 8 * V
    m_pad = _round_up(M, m_group)

    x = mvimages.reshape(M, K)
    if m_pad != M or k_pad != K:
        x = jnp.pad(x, ((0, m_pad - M), (0, k_pad - K)))
    w_bf = w.astype(jnp.bfloat16)
    if k_pad != K or d_pad != D:
        w_bf = jnp.pad(w_bf, ((0, k_pad - K), (0, d_pad - D)))
    b2 = b.reshape(1, D).astype(jnp.float32)
    if d_pad != D:
        b2 = jnp.pad(b2, ((0, 0), (0, d_pad - D)))

    # ---- tiling (VMEM-budget aware, >=2 M tiles when possible)
    tm, tk = _choose_tiles(m_pad, k_pad, d_pad, V, _VMEM_TILE_BUDGET)
    tb = tm // V
    grid = (m_pad // tm, k_pad // tk)

    flops = 2 * m_pad * k_pad * d_pad
    bytes_accessed = (m_pad * k_pad * 4                  # x read once
                      + grid[0] * k_pad * d_pad * 2      # W re-read per M tile
                      + m_pad * d_pad * 4                # aux writeback
                      + (m_pad // V) * d_pad * 4)        # pooled writeback

    aux_flat, pooled = pl.pallas_call(
        functools.partial(_backbone_view_avg_kernel, views=V),
        out_shape=(
            jax.ShapeDtypeStruct((m_pad, d_pad), jnp.float32),      # aux (flat)
            jax.ShapeDtypeStruct((m_pad // V, d_pad), jnp.float32),  # pooled
        ),
        grid_spec=pltpu.PrefetchScalarGridSpec(
            num_scalar_prefetch=0,
            grid=grid,
            in_specs=[
                pl.BlockSpec((tm, tk), lambda i, k: (i, k)),     # x row tile (f32)
                pl.BlockSpec((tk, d_pad), lambda i, k: (k, 0)),  # weight K-slice
                pl.BlockSpec((1, d_pad), lambda i, k: (0, 0)),   # bias (constant)
            ],
            out_specs=[
                pl.BlockSpec((tm, d_pad), lambda i, k: (i, 0)),  # aux / accumulator
                pl.BlockSpec((tb, d_pad), lambda i, k: (i, 0)),  # pooled
            ],
        ),
        compiler_params=pltpu.CompilerParams(
            dimension_semantics=("parallel", "arbitrary"),
            vmem_limit_bytes=_VMEM_LIMIT_BYTES,
        ),
        cost_estimate=pl.CostEstimate(flops=flops, transcendentals=0,
                                      bytes_accessed=bytes_accessed),
    )(x, w_bf, b2)

    if m_pad != M or d_pad != D:
        aux_flat = aux_flat[:M, :D]
        pooled = pooled[:B, :D]
    aux = aux_flat.reshape(B, V, D)          # contiguous reshape, no transpose
    pooled_view = pooled.reshape(B, -1)      # .view(B, -1)
    return jnp.squeeze(pooled_view), aux     # .squeeze(), aux


if __name__ == "__main__":
    key = jax.random.PRNGKey(0)
    B, V, C, H, W = 2, 4, 3, 8, 8         # small multi-view NCHW input
    D = 128                                # feature dim of the synthetic backbone
    K = C * H * W

    k_x, k_w, k_b = jax.random.split(key, 3)
    mvimages = jax.random.normal(k_x, (B, V, C, H, W), dtype=jnp.float32)
    w = jax.random.normal(k_w, (K, D), dtype=jnp.float32) * 0.02
    b = jax.random.normal(k_b, (D,), dtype=jnp.float32) * 0.02

    pooled, aux = view_avg_aggregate(mvimages, w, b)
    jax.block_until_ready((pooled, aux))

    # Reference in plain JAX, using the same bf16 matmul operands / f32 accum.
    x_bf = mvimages.reshape(B, V, K).astype(jnp.bfloat16)
    w_bf = w.astype(jnp.bfloat16)
    feat_ref = jnp.einsum("bvk,kd->bvd", x_bf, w_bf,
                          preferred_element_type=jnp.float32) + b
    pooled_ref = jnp.squeeze(jnp.mean(feat_ref, axis=1).reshape(B, -1))

    assert aux.shape == (B, V, D) and pooled.shape == pooled_ref.shape
    assert jnp.allclose(aux, feat_ref, atol=5e-3, rtol=5e-3)
    assert jnp.allclose(pooled, pooled_ref, atol=5e-3, rtol=5e-3)

    print("KERNEL_OK")
</pallas_src>

<mosaic_0001>
module attributes {stable_mosaic.version = 11 : i64} {
  func.func @_backbone_view_avg_kernel(%arg0: i32, %arg1: i32, %arg2: memref<32x256xf32, #tpu.memory_space<vmem>>, %arg3: memref<256x128xbf16, #tpu.memory_space<vmem>>, %arg4: memref<1x128xf32, #tpu.memory_space<vmem>>, %arg5: memref<32x128xf32, #tpu.memory_space<vmem>>, %arg6: memref<8x128xf32, #tpu.memory_space<vmem>>) attributes {dimension_semantics = [#tpu.dimension_semantics<parallel>, #tpu.dimension_semantics<arbitrary>], iteration_bounds = array<i64: 1, 1>, scalar_prefetch = 0 : i64, scratch_operands = 0 : i64, tpu.core_type = #tpu.core_type<tc>, window_params = [{transform_indices = @transform_0, window_bounds = array<i64: 32, 256>}, {transform_indices = @transform_1, window_bounds = array<i64: 256, 128>}, {pipeline_mode = #tpu.pipeline_mode<synchronous>, transform_indices = @transform_2, window_bounds = array<i64: 1, 128>}, {transform_indices = @transform_3, window_bounds = array<i64: 32, 128>}, {transform_indices = @transform_4, window_bounds = array<i64: 8, 128>}]} {
    %c0_i32 = arith.constant 0 : i32
    %0 = arith.cmpi eq, %arg1, %c0_i32 : i32
    %1 = arith.extui %0 : i1 to i32
    %c0_i32_0 = arith.constant 0 : i32
    %2 = arith.cmpi ne, %1, %c0_i32_0 : i32
    scf.if %2 {
      %cst_10 = arith.constant 0.000000e+00 : f32
      %13 = vector.broadcast %cst_10 : f32 to vector<32x128xf32>
      %c0_11 = arith.constant 0 : index
      %c0_12 = arith.constant 0 : index
      %14 = vector.load %arg5[%c0_11, %c0_12] : memref<32x128xf32, #tpu.memory_space<vmem>>, vector<32x128xf32>
      tpu.vector_store %arg5[%c0_11, %c0_12], %13 {strides = array<i32>} : memref<32x128xf32, #tpu.memory_space<vmem>>, vector<32x128xf32>,
    } else {
    }
    %c0 = arith.constant 0 : index
    %c0_1 = arith.constant 0 : index
    %3 = vector.load %arg5[%c0, %c0_1] : memref<32x128xf32, #tpu.memory_space<vmem>>, vector<32x128xf32>
    %c0_2 = arith.constant 0 : index
    %c0_3 = arith.constant 0 : index
    %4 = vector.load %arg2[%c0_2, %c0_3] : memref<32x256xf32, #tpu.memory_space<vmem>>, vector<32x256xf32>
    %5 = arith.truncf %4 : vector<32x256xf32> to vector<32x256xbf16>
    %c0_4 = arith.constant 0 : index
    %c0_5 = arith.constant 0 : index
    %6 = vector.load %arg3[%c0_4, %c0_5] : memref<256x128xbf16, #tpu.memory_space<vmem>>, vector<256x128xbf16>
    %cst = arith.constant dense<0.000000e+00> : vector<32x128xf32>
    %7 = tpu.matmul %5, %6, %cst {dimension_numbers = #tpu.dot_dimension_numbers<[1], [0], [0], [1], [0, 0, 1, 1], [], []>} : vector<32x256xbf16>, vector<256x128xbf16>, vector<32x128xf32> -> vector<32x128xf32>
    %8 = arith.addf %3, %7 : vector<32x128xf32>
    %c0_6 = arith.constant 0 : index
    %c0_7 = arith.constant 0 : index
    %9 = vector.load %arg5[%c0_6, %c0_7] : memref<32x128xf32, #tpu.memory_space<vmem>>, vector<32x128xf32>
    tpu.vector_store %arg5[%c0_6, %c0_7], %8 {strides = array<i32>} : memref<32x128xf32, #tpu.memory_space<vmem>>, vector<32x128xf32>,
    %c0_i32_8 = arith.constant 0 : i32
    %10 = arith.cmpi eq, %arg1, %c0_i32_8 : i32
    %11 = arith.extui %10 : i1 to i32
    %c0_i32_9 = arith.constant 0 : i32
    %12 = arith.cmpi ne, %11, %c0_i32_9 : i32
    scf.if %12 {
      %c0_10 = arith.constant 0 : index
      %c0_11 = arith.constant 0 : index
      %13 = vector.load %arg5[%c0_10, %c0_11] : memref<32x128xf32, #tpu.memory_space<vmem>>, vector<32x128xf32>
      %c0_12 = arith.constant 0 : index
      %c0_13 = arith.constant 0 : index
      %14 = vector.load %arg4[%c0_12, %c0_13] : memref<1x128xf32, #tpu.memory_space<vmem>>, vector<1x128xf32>
      %15 = vector.broadcast %14 : vector<1x128xf32> to vector<32x128xf32>
      %16 = arith.addf %13, %15 : vector<32x128xf32>
      %c0_14 = arith.constant 0 : index
      %c0_15 = arith.constant 0 : index
      %17 = vector.load %arg5[%c0_14, %c0_15] : memref<32x128xf32, #tpu.memory_space<vmem>>, vector<32x128xf32>
      tpu.vector_store %arg5[%c0_14, %c0_15], %16 {strides = array<i32>} : memref<32x128xf32, #tpu.memory_space<vmem>>, vector<32x128xf32>,
      %c0_16 = arith.constant 0 : index
      %c0_17 = arith.constant 0 : index
      %18 = tpu.strided_load %arg5[%c0_16, %c0_17] {strides = array<i32: 4, 1>} : memref<32x128xf32, #tpu.memory_space<vmem>>, vector<8x128xf32>
      %c1 = arith.constant 1 : index
      %c0_18 = arith.constant 0 : index
      %19 = tpu.strided_load %arg5[%c1, %c0_18] {strides = array<i32: 4, 1>} : memref<32x128xf32, #tpu.memory_space<vmem>>, vector<8x128xf32>
      %20 = arith.addf %18, %19 : vector<8x128xf32>
      %c2 = arith.constant 2 : index
      %c0_19 = arith.constant 0 : index
      %21 = tpu.strided_load %arg5[%c2, %c0_19] {strides = array<i32: 4, 1>} : memref<32x128xf32, #tpu.memory_space<vmem>>, vector<8x128xf32>
      %22 = arith.addf %20, %21 : vector<8x128xf32>
      %c3 = arith.constant 3 : index
      %c0_20 = arith.constant 0 : index
      %23 = tpu.strided_load %arg5[%c3, %c0_20] {strides = array<i32: 4, 1>} : memref<32x128xf32, #tpu.memory_space<vmem>>, vector<8x128xf32>
      %24 = arith.addf %22, %23 : vector<8x128xf32>
      %cst_21 = arith.constant 2.500000e-01 : f32
      %25 = vector.broadcast %cst_21 : f32 to vector<8x128xf32>
      %26 = arith.mulf %24, %25 : vector<8x128xf32>
      %c0_22 = arith.constant 0 : index
      %c0_23 = arith.constant 0 : index
      %27 = vector.load %arg6[%c0_22, %c0_23] : memref<8x128xf32, #tpu.memory_space<vmem>>, vector<8x128xf32>
      tpu.vector_store %arg6[%c0_22, %c0_23], %26 {strides = array<i32>} : memref<8x128xf32, #tpu.memory_space<vmem>>, vector<8x128xf32>,
    } else {
    }
    return
  }
  func.func @transform_0(%arg0: i32, %arg1: i32) -> (i32, i32) {
    %c0_i32 = arith.constant 0 : i32
    return %arg0, %arg1 : i32, i32
  }
  func.func @transform_1(%arg0: i32, %arg1: i32) -> (i32, i32) {
    %c0_i32 = arith.constant 0 : i32
    %c0_i32_0 = arith.constant 0 : i32
    return %arg1, %c0_i32 : i32, i32
  }
  func.func @transform_2(%arg0: i32, %arg1: i32) -> (i32, i32) {
    %c0_i32 = arith.constant 0 : i32
    %c0_i32_0 = arith.constant 0 : i32
    %c0_i32_1 = arith.constant 0 : i32
    return %c0_i32, %c0_i32_0 : i32, i32
  }
  func.func @transform_3(%arg0: i32, %arg1: i32) -> (i32, i32) {
    %c0_i32 = arith.constant 0 : i32
    %c0_i32_0 = arith.constant 0 : i32
    return %arg0, %c0_i32 : i32, i32
  }
  func.func @transform_4(%arg0: i32, %arg1: i32) -> (i32, i32) {
    %c0_i32 = arith.constant 0 : i32
    %c0_i32_0 = arith.constant 0 : i32
    return %arg0, %c0_i32 : i32, i32
  }
}

</mosaic_0001>

<llo_original>
// kernel: tpu_custom_call.1
$region0: #{tpu_custom_call.1}
  #allocation0 [shape = 'u32[]', space=smem, size = 0x4, offset = 0x4, fixed_abs, tag = 'smem constant byte address 0x4 - core index']
  #allocation1 [shape = 'u32[72,128]{1,0:T(1,128)}', space=vmem, size = 0x9000, scoped, tag = 'internal scratch']
  %s0 = inlined_call_operand.hbm [shape: f32[32,256], index: 0, kind: input, shape index: {}]
  %s1 = inlined_call_operand.hbm [shape: bf16[256,128], index: 1, kind: input, shape index: {}]
  %s2 = inlined_call_operand.vmem [shape: f32[1,128], index: 2, kind: input, shape index: {}]
  %s3 = inlined_call_operand.hbm [shape: f32[32,128], index: 3, kind: output, shape index: {0}]
  %s4 = inlined_call_operand.hbm [shape: f32[8,128], index: 4, kind: output, shape index: {1}]
  %5 = xla_tuple %s3, %s4
  %s6 = sld [smem:[#allocation0]]
  $region46: #{tpu_custom_call.1} parent=0
    _
  %s8 = ssub.s32 1, %s6
  %s9 = scalar_select 0, %s8, %s6
  $region1: #{tpu_custom_call.1} parent=0
    #allocation2 [shape = 'u8[32768]{0}', space=vmem, size = 0x8000, scoped, tag = 'input window, operand 0, single buffered']
    #allocation3 [shape = 's32[1]{0}', space=sflag, size = 0x4, scoped, tag = 'scoped memory for tpu_custom_call.1']
    #allocation4 [shape = 's32[1]{0}', space=sflag, size = 0x4, scoped, tag = 'scoped memory for tpu_custom_call.1']
    #allocation5 [shape = 'u8[65536]{0}', space=vmem, size = 0x10000, scoped, tag = 'input window, operand 1, single buffered']
    #allocation6 [shape = 's32[1]{0}', space=sflag, size = 0x4, scoped, tag = 'scoped memory for tpu_custom_call.1']
    #allocation7 [shape = 'u8[16384]{0}', space=vmem, size = 0x4000, scoped, tag = 'output window, operand 0, single buffered']
    #allocation8 [shape = 'u8[4096]{0}', space=vmem, size = 0x1000, scoped, tag = 'output window, operand 1, single buffered']
    #allocation9 [shape = 's32[1]{0}', space=sflag, size = 0x4, scoped, tag = 'scoped memory for tpu_custom_call.1']
    %10 = vsyncpa [#allocation3], 0
    %11 = vsyncpa [#allocation6], 0
    %12 = vsyncpa [#allocation4], 0
    %13 = vsyncpa [#allocation9], 0
    // Predicated region
    $region2: #{tpu_custom_call.1} parent=1 // pred_check
      _
    $region3: #{tpu_custom_call.1} parent=1 // pred_check_branch
      %15 = sbr.rel (0) target = $region5
    $region4: #{tpu_custom_call.1} parent=1 // pred_region
      %17 = vsyncadd [#allocation3], 0
      %s18 = sshll.u32 %s0, 4
      %s19 = int_to_ptr.hbm [resolvable:$true] %s18
      %s20 = sshll.u32 [#allocation2], 4
      %s21 = int_to_ptr.vmem [resolvable:$true] %s20
      %26 = dma.hbm_to_vmem [thread:$0]  %s19, 1024, %s21, [#allocation3], 256, 256, 16
    $region5: #{tpu_custom_call.1} parent=1 // pred_fallthru
      _
    // Predicated region
    $region6: #{tpu_custom_call.1} parent=1 // pred_check
      _
    $region7: #{tpu_custom_call.1} parent=1 // pred_check_branch
      %28 = sbr.rel (0) target = $region9
    $region8: #{tpu_custom_call.1} parent=1 // pred_region
      %30 = vsyncadd [#allocation6], 0
      %s31 = sshll.u32 %s1, 4
      %s32 = int_to_ptr.hbm [resolvable:$true] %s31
      %s33 = sshll.u32 [#allocation5], 4
      %s34 = int_to_ptr.vmem [resolvable:$true] %s33
      %39 = dma.hbm_to_vmem [thread:$0]  %s32, 2048, %s34, [#allocation6], 64, 64, 4
    $region9: #{tpu_custom_call.1} parent=1 // pred_fallthru
      _
    // Predicated region
    $region10: #{tpu_custom_call.1} parent=1 // pred_check
      _
    $region11: #{tpu_custom_call.1} parent=1 // pred_check_branch
      %41 = sbr.rel (0) target = $region13
    $region12: #{tpu_custom_call.1} parent=1 // pred_region
      _
    $region13: #{tpu_custom_call.1} parent=1 // pred_fallthru
      _
    // Predicated region
    $region14: #{tpu_custom_call.1} parent=1 // pred_check
      _
    $region15: #{tpu_custom_call.1} parent=1 // pred_check_branch
      %43 = sbr.rel (0) target = $region17
    $region16: #{tpu_custom_call.1} parent=1 // pred_region
      %45 = dma.done [#allocation3], 1024
    $region17: #{tpu_custom_call.1} parent=1 // pred_fallthru
      _
    // Predicated region
    $region18: #{tpu_custom_call.1} parent=1 // pred_check
      _
    $region19: #{tpu_custom_call.1} parent=1 // pred_check_branch
      %47 = sbr.rel (0) target = $region21
    $region20: #{tpu_custom_call.1} parent=1 // pred_region
      %49 = dma.done [#allocation6], 2048
    $region21: #{tpu_custom_call.1} parent=1 // pred_fallthru
      _
    %p50 = scmp.eq.s32.totalorder 0, 0
    // Predicated region
    $region22: #{tpu_custom_call.1} parent=1 // pred_check
      %p51 = pneg %p50
    $region23: #{tpu_custom_call.1} parent=1 // pred_check_branch
      %53 = sbr.rel (%p51) target = $region25
    $region24: #{tpu_custom_call.1} parent=1 // pred_region
      %54 = vst [vmem:[#allocation7] sm:$0xff] 0.0
      %55 = vst [vmem:[#allocation7 + $0x8] sm:$0xff] 0.0
      %56 = vst [vmem:[#allocation7 + $0x10] sm:$0xff] 0.0
      %57 = vst [vmem:[#allocation7 + $0x18] sm:$0xff] 0.0
    $region25: #{tpu_custom_call.1} parent=1 // pred_fallthru
      _
    %v58 = vld [vmem:[#allocation7] sm:$0xff]
    %v59 = vld [vmem:[#allocation7 + $0x8] sm:$0xff]
    %v60 = vld [vmem:[#allocation7 + $0x10] sm:$0xff]
    %v61 = vld [vmem:[#allocation7 + $0x18] sm:$0xff]
    %v62 = vld [vmem:[#allocation2] sm:$0xff]
    %v63 = vld [vmem:[#allocation2 + $0x8] sm:$0xff]
    %v64 = vld [vmem:[#allocation2 + $0x10] sm:$0xff]
    %v65 = vld [vmem:[#allocation2 + $0x18] sm:$0xff]
    %v66 = vld [vmem:[#allocation2 + $0x20] sm:$0xff]
    %v67 = vld [vmem:[#allocation2 + $0x28] sm:$0xff]
    %v68 = vld [vmem:[#allocation2 + $0x30] sm:$0xff]
    %v69 = vld [vmem:[#allocation2 + $0x38] sm:$0xff]
    %v70 = vpack.c.bf16 %v64, %v62
    %v71 = vpack.c.bf16 %v65, %v63
    %v72 = vpack.c.bf16 %v68, %v66
    %v73 = vpack.c.bf16 %v69, %v67
    %v74 = vld [vmem:[#allocation5] sm:$0xf]
    %v75 = vld [vmem:[#allocation5 + $0x4] sm:$0xf]
    %v76 = vld [vmem:[#allocation5 + $0x8] sm:$0xf]
    %v77 = vld [vmem:[#allocation5 + $0xc] sm:$0xf]
    %v78 = vld [vmem:[#allocation5 + $0x10] sm:$0xf]
    %v79 = vld [vmem:[#allocation5 + $0x14] sm:$0xf]
    %v80 = vld [vmem:[#allocation5 + $0x18] sm:$0xf]
    %v81 = vld [vmem:[#allocation5 + $0x1c] sm:$0xf]
    %v82 = vld [vmem:[#allocation5 + $0x20] sm:$0xf]
    %v83 = vld [vmem:[#allocation5 + $0x24] sm:$0xf]
    %v84 = vld [vmem:[#allocation5 + $0x28] sm:$0xf]
    %v85 = vld [vmem:[#allocation5 + $0x2c] sm:$0xf]
    %v86 = vld [vmem:[#allocation5 + $0x30] sm:$0xf]
    %v87 = vld [vmem:[#allocation5 + $0x34] sm:$0xf]
    %v88 = vld [vmem:[#allocation5 + $0x38] sm:$0xf]
    %v89 = vld [vmem:[#allocation5 + $0x3c] sm:$0xf]
    %v90 = vld [vmem:[#allocation5 + $0x40] sm:$0xf]
    %v91 = vld [vmem:[#allocation5 + $0x44] sm:$0xf]
    %v92 = vld [vmem:[#allocation5 + $0x48] sm:$0xf]
    %v93 = vld [vmem:[#allocation5 + $0x4c] sm:$0xf]
    %v94 = vld [vmem:[#allocation5 + $0x50] sm:$0xf]
    %v95 = vld [vmem:[#allocation5 + $0x54] sm:$0xf]
    %v96 = vld [vmem:[#allocation5 + $0x58] sm:$0xf]
    %v97 = vld [vmem:[#allocation5 + $0x5c] sm:$0xf]
    %v98 = vld [vmem:[#allocation5 + $0x60] sm:$0xf]
    %v99 = vld [vmem:[#allocation5 + $0x64] sm:$0xf]
    %v100 = vld [vmem:[#allocation5 + $0x68] sm:$0xf]
    %v101 = vld [vmem:[#allocation5 + $0x6c] sm:$0xf]
    %v102 = vld [vmem:[#allocation5 + $0x70] sm:$0xf]
    %v103 = vld [vmem:[#allocation5 + $0x74] sm:$0xf]
    %v104 = vld [vmem:[#allocation5 + $0x78] sm:$0xf]
    %v105 = vld [vmem:[#allocation5 + $0x7c] sm:$0xf]
    %v138 = vunpack.c.l.b16 %v74
    %v139 = vunpack.c.l.b16 %v75
    %v140 = vunpack.c.l.b16 %v76
    %v141 = vunpack.c.l.b16 %v77
    %v142 = vunpack.c.l.b16 %v78
    %v143 = vunpack.c.l.b16 %v79
    %v144 = vunpack.c.l.b16 %v80
    %v145 = vunpack.c.l.b16 %v81
    %v146 = vunpack.c.l.b16 %v82
    %v147 = vunpack.c.l.b16 %v83
    %v148 = vunpack.c.l.b16 %v84
    %v149 = vunpack.c.l.b16 %v85
    %v150 = vunpack.c.l.b16 %v86
    %v151 = vunpack.c.l.b16 %v87
    %v152 = vunpack.c.l.b16 %v88
    %v153 = vunpack.c.l.b16 %v89
    %v154 = vunpack.c.l.b16 %v90
    %v155 = vunpack.c.l.b16 %v91
    %v156 = vunpack.c.l.b16 %v92
    %v157 = vunpack.c.l.b16 %v93
    %v158 = vunpack.c.l.b16 %v94
    %v159 = vunpack.c.l.b16 %v95
    %v160 = vunpack.c.l.b16 %v96
    %v161 = vunpack.c.l.b16 %v97
    %v162 = vunpack.c.l.b16 %v98
    %v163 = vunpack.c.l.b16 %v99
    %v164 = vunpack.c.l.b16 %v100
    %v165 = vunpack.c.l.b16 %v101
    %v166 = vunpack.c.l.b16 %v102
    %v167 = vunpack.c.l.b16 %v103
    %v168 = vunpack.c.l.b16 %v104
    %v169 = vunpack.c.l.b16 %v105
    %v170 = vpack.c.b16 %v139, %v138
    %v171 = vpack.c.b16 %v141, %v140
    %v172 = vpack.c.b16 %v143, %v142
    %v173 = vpack.c.b16 %v145, %v144
    %v174 = vpack.c.b16 %v147, %v146
    %v175 = vpack.c.b16 %v149, %v148
    %v176 = vpack.c.b16 %v151, %v150
    %v177 = vpack.c.b16 %v153, %v152
    %v178 = vpack.c.b16 %v155, %v154
    %v179 = vpack.c.b16 %v157, %v156
    %v180 = vpack.c.b16 %v159, %v158
    %v181 = vpack.c.b16 %v161, %v160
    %v182 = vpack.c.b16 %v163, %v162
    %v183 = vpack.c.b16 %v165, %v164
    %v184 = vpack.c.b16 %v167, %v166
    %v185 = vpack.c.b16 %v169, %v168
    %202 = vmatpush.bf16.msra.mxu0 %v177
    %203 = vmatpush.bf16.msra.mxu0 %v176
    %204 = vmatpush.bf16.msra.mxu0 %v175
    %205 = vmatpush.bf16.msra.mxu0 %v174
    %206 = vmatpush.bf16.msra.mxu0 %v173
    %207 = vmatpush.bf16.msra.mxu0 %v172
    %208 = vmatpush.bf16.msra.mxu0 %v171
    %209 = vmatpush.bf16.msra.mxu0 %v170
    %210 = vmatmul.bf16.gmra.mxu0 %v70
    %v211 = vpop.f32.mrf.mxu0
    %v212 = vadd.f32 0.0, %v211
    %v213 = vpop.f32.mrf.mxu0
    %v214 = vadd.f32 0.0, %v213
    %215 = vmatmul.bf16.gmra.mxu0 %v72
    %v216 = vpop.f32.mrf.mxu0
    %v217 = vadd.f32 0.0, %v216
    %v218 = vpop.f32.mrf.mxu0
    %v219 = vadd.f32 0.0, %v218
    %220 = vdwg.mxu0
    %221 = vmatpush.bf16.msra.mxu0 %v185
    %222 = vmatpush.bf16.msra.mxu0 %v184
    %223 = vmatpush.bf16.msra.mxu0 %v183
    %224 = vmatpush.bf16.msra.mxu0 %v182
    %225 = vmatpush.bf16.msra.mxu0 %v181
    %226 = vmatpush.bf16.msra.mxu0 %v180
    %227 = vmatpush.bf16.msra.mxu0 %v179
    %228 = vmatpush.bf16.msra.mxu0 %v178
    %229 = vmatmul.bf16.gmra.mxu0 %v71
    %v230 = vpop.f32.mrf.mxu0
    %v231 = vadd.f32 %v212, %v230
    %v232 = vpop.f32.mrf.mxu0
    %v233 = vadd.f32 %v214, %v232
    %234 = vmatmul.bf16.gmra.mxu0 %v73
    %v235 = vpop.f32.mrf.mxu0
    %v236 = vadd.f32 %v217, %v235
    %v237 = vpop.f32.mrf.mxu0
    %v238 = vadd.f32 %v219, %v237
    %239 = vdwg.mxu0
    %v240 = vadd.f32 %v58, %v231
    %v241 = vadd.f32 %v59, %v233
    %v242 = vadd.f32 %v60, %v236
    %v243 = vadd.f32 %v61, %v238
    %244 = vst [vmem:[#allocation7] sm:$0xff] %v240
    %245 = vst [vmem:[#allocation7 + $0x8] sm:$0xff] %v241
    %246 = vst [vmem:[#allocation7 + $0x10] sm:$0xff] %v242
    %247 = vst [vmem:[#allocation7 + $0x18] sm:$0xff] %v243
    // Predicated region
    $region26: #{tpu_custom_call.1} parent=1 // pred_check
      %p248 = pneg %p50
    $region27: #{tpu_custom_call.1} parent=1 // pred_check_branch
      %250 = sbr.rel (%p248) target = $region29
    $region28: #{tpu_custom_call.1} parent=1 // pred_region
      %v251 = vld [vmem:[#allocation7] sm:$0xff]
      %v252 = vld [vmem:[#allocation7 + $0x8] sm:$0xff]
      %v253 = vld [vmem:[#allocation7 + $0x10] sm:$0xff]
      %v254 = vld [vmem:[#allocation7 + $0x18] sm:$0xff]
      %v255 = vld [vmem:[%s2] sm:$0x1]
      %v257 = vperm.slane %v255, 0
      %v259 = vadd.f32 %v251, %v257
      %v260 = vadd.f32 %v252, %v257
      %v261 = vadd.f32 %v253, %v257
      %v262 = vadd.f32 %v254, %v257
      %263 = vst [vmem:[#allocation7] sm:$0xff] %v259
      %264 = vst [vmem:[#allocation7 + $0x8] sm:$0xff] %v260
      %265 = vst [vmem:[#allocation7 + $0x10] sm:$0xff] %v261
      %266 = vst [vmem:[#allocation7 + $0x18] sm:$0xff] %v262
      %v267 = vld [vmem:[#allocation7] ss:$4 sm:$0xff]
      %s268 = scalar_lea.vmem [#allocation7], 1
      %v269 = vld [vmem:[%s268] ss:$4 sm:$0xff]
      %v270 = vadd.f32 %v267, %v269
      %s271 = scalar_lea.vmem [#allocation7], 2
      %v272 = vld [vmem:[%s271] ss:$4 sm:$0xff]
      %v273 = vadd.f32 %v270, %v272
      %s274 = scalar_lea.vmem [#allocation7], 3
      %v275 = vld [vmem:[%s274] ss:$4 sm:$0xff]
      %v276 = vadd.f32 %v273, %v275
      %v277 = vmul.f32 %v276, 0.25
      %278 = vst [vmem:[#allocation8] sm:$0xff] %v277
    $region29: #{tpu_custom_call.1} parent=1 // pred_fallthru
      _
    // Predicated region
    $region30: #{tpu_custom_call.1} parent=1 // pred_check
      _
    $region31: #{tpu_custom_call.1} parent=1 // pred_check_branch
      %280 = sbr.rel (0) target = $region33
    $region32: #{tpu_custom_call.1} parent=1 // pred_region
      %282 = vsyncadd [#allocation4], 0
      %s283 = sshll.u32 [#allocation7], 4
      %s284 = int_to_ptr.vmem [resolvable:$true] %s283
      %s285 = sshll.u32 %s3, 4
      %s286 = int_to_ptr.hbm [resolvable:$true] %s285
      %291 = dma.vmem_to_hbm [thread:$0]  %s284, 512, %s286, [#allocation4], 128, 128, 8
    $region33: #{tpu_custom_call.1} parent=1 // pred_fallthru
      _
    // Predicated region
    $region34: #{tpu_custom_call.1} parent=1 // pred_check
      _
    $region35: #{tpu_custom_call.1} parent=1 // pred_check_branch
      %293 = sbr.rel (0) target = $region37
    $region36: #{tpu_custom_call.1} parent=1 // pred_region
      %295 = vsyncadd [#allocation9], 0
      %s297 = sshll.u32 [#allocation8], 4
      %s298 = int_to_ptr.vmem [resolvable:$true] %s297
      %s299 = sshll.u32 %s4, 4
      %s300 = int_to_ptr.hbm [resolvable:$true] %s299
      %302 = dma.vmem_to_hbm [thread:$0]  %s298, 128, %s300, [#allocation9]
    $region37: #{tpu_custom_call.1} parent=1 // pred_fallthru
      _
    // Predicated region
    $region38: #{tpu_custom_call.1} parent=1 // pred_check
      _
    $region39: #{tpu_custom_call.1} parent=1 // pred_check_branch
      %304 = sbr.rel (0) target = $region41
    $region40: #{tpu_custom_call.1} parent=1 // pred_region
      %306 = dma.done [#allocation4], 512
    $region41: #{tpu_custom_call.1} parent=1 // pred_fallthru
      _
    // Predicated region
    $region42: #{tpu_custom_call.1} parent=1 // pred_check
      _
    $region43: #{tpu_custom_call.1} parent=1 // pred_check_branch
      %308 = sbr.rel (0) target = $region45
    $region44: #{tpu_custom_call.1} parent=1 // pred_region
      %310 = dma.done [#allocation9], 128
    $region45: #{tpu_custom_call.1} parent=1 // pred_fallthru
      _
    %311 = vsyncpa [#allocation3], 1
    %312 = vsyncpa [#allocation6], 1
    %313 = vsyncpa [#allocation4], 1
    %314 = vsyncpa [#allocation9], 1

</llo_original>
